<compile_context>
chip_gen: v7x
topology: tpu7x:2x2x1
jax: 0.10.0
libtpu: 0.0.40
codegen_flags: <defaults>
</compile_context>

<pallas_src>
import jax
import jax.numpy as jnp
from jax.experimental import pallas as pl
from jax.experimental.pallas import tpu as pltpu

INPUT_DIM = 20     # signals feature dim
HIDDEN_DIM = 32
OUTPUT_DIM = 2     # binary task
LN_EPS = 1e-5


def _mlp_kernel(x_ref, w1t_ref, col_ref, w2t_ref, o_ref):
    """Fused MLP head: Linear -> LayerNorm -> ReLU -> (Dropout=id, eval) -> Linear.

    Hidden activations are carried transposed (features on sublanes, batch on lanes).

    x_ref:   (TB, INPUT_DIM)          batch tile of signals (batch on sublanes)
    w1t_ref: (HIDDEN, INPUT_DIM)      first linear weight, PyTorch [out, in] layout
    col_ref: (HIDDEN, 4)              columns: [b1, ln_gamma, ln_beta, b2 (zero-padded)]
    w2t_ref: (OUT, HIDDEN)            second linear weight, PyTorch [out, in] layout
    o_ref:   (OUT, TB)                transposed logits (lane-dense store)
    """
    x = x_ref[...]                                   # (TB, IN) f32
    b1 = col_ref[:, 0:1]                             # (HID, 1)
    gamma = col_ref[:, 1:2]                          # (HID, 1)
    beta = col_ref[:, 2:3]                           # (HID, 1)
    b2 = col_ref[0:OUTPUT_DIM, 3:4]                  # (OUT, 1)

    # Linear 1, computed transposed:  h[f, b] = sum_i w1t[f, i] * x[b, i]   (A @ B^T on MXU)
    h = jax.lax.dot_general(
        w1t_ref[...], x,
        dimension_numbers=(((1,), (1,)), ((), ())),
        preferred_element_type=jnp.float32,
    ) + b1                                           # (HID, TB), lane-dense

    # LayerNorm over the feature axis (= sublane axis here).  Biased variance, eps inside
    # rsqrt -> matches PyTorch nn.LayerNorm.  Strictly per-column (per-example), so garbage
    # columns from a ragged last block can never contaminate valid columns.
    mu = jnp.mean(h, axis=0, keepdims=True)
    var = jnp.mean((h - mu) * (h - mu), axis=0, keepdims=True)
    hn = (h - mu) * jax.lax.rsqrt(var + LN_EPS) * gamma + beta

    # ReLU; Dropout(0.1) is identity at inference time.
    hr = jnp.maximum(hn, 0.0)

    # Linear 2 in native MXU form; result stays lane-dense for an unmasked store.
    out_t = jnp.dot(w2t_ref[...], hr, preferred_element_type=jnp.float32) + b2
    o_ref[...] = out_t.astype(o_ref.dtype)


def _round_up(x, m):
    return ((x + m - 1) // m) * m


def _tensorcores_per_chip():
    """2 on v7x (the only target generation where ("parallel",) shards the grid), else 1."""
    try:
        kind = jax.devices()[0].device_kind.lower()
    except Exception:
        return 1
    return 2 if ("v7" in kind or "7x" in kind) else 1


def pack_params(params):
    """Repack natural (PyTorch-shaped) params into the kernel layout."""
    w1, b1, gamma, beta, w2, b2 = params
    w1t = w1.T                                                   # (HID, IN)
    w2t = w2.T                                                   # (OUT, HID)
    b2_pad = jnp.zeros((HIDDEN_DIM,), b2.dtype).at[:OUTPUT_DIM].set(b2)
    cols = jnp.stack([b1, gamma, beta, b2_pad], axis=1)          # (HID, 4)
    return w1t, cols, w2t


def aggregation_transformer_forward(signals, params, *, max_tb=4096):
    """signals: [B, INPUT_DIM] float32.  Returns logits [B, OUTPUT_DIM]."""
    B, F = signals.shape
    assert F == INPUT_DIM

    w1t, cols, w2t = pack_params(params)

    # Large, lane-aligned batch tile.  The grid is ragged (grid = cdiv(B, tb)); no wrapper
    # pad copy is needed because the computation is strictly per-example and Pallas drops
    # out-of-range output columns at writeback.
    tb = min(max_tb, _round_up(max(B, 1), 128))
    if _tensorcores_per_chip() >= 2 and pl.cdiv(B, tb) < 2 and tb >= 256:
        # Only on v7x: ensure >= 2 grid steps so both TensorCores get work.
        tb = max(128, (tb // 2 // 128) * 128)
    grid = (pl.cdiv(B, tb),)

    out_t = pl.pallas_call(
        _mlp_kernel,
        out_shape=jax.ShapeDtypeStruct((OUTPUT_DIM, B), jnp.float32),
        grid_spec=pl.GridSpec(
            grid=grid,
            in_specs=[
                pl.BlockSpec((tb, INPUT_DIM), lambda i: (i, 0)),             # signals tile
                pl.BlockSpec((HIDDEN_DIM, INPUT_DIM), lambda i: (0, 0)),     # w1^T (resident)
                pl.BlockSpec((HIDDEN_DIM, 4), lambda i: (0, 0)),             # [b1,gamma,beta,b2]
                pl.BlockSpec((OUTPUT_DIM, HIDDEN_DIM), lambda i: (0, 0)),    # w2^T (resident)
            ],
            out_specs=pl.BlockSpec((OUTPUT_DIM, tb), lambda i: (0, i)),      # lane-dense logits^T
        ),
        compiler_params=pltpu.CompilerParams(
            dimension_semantics=("parallel",),
        ),
    )(signals, w1t, cols, w2t)

    return out_t.T   # back to [B, OUTPUT_DIM]


def init_params(key):
    """Deterministic init matching the PyTorch module's parameter shapes.

    nn.Linear(in, out): weight [out, in] (stored here as [in, out]), bias [out].
    nn.LayerNorm(h):    gamma = ones, beta = zeros.
    """
    k1, k2, k3, k4 = jax.random.split(key, 4)
    bound1 = 1.0 / (INPUT_DIM ** 0.5)
    bound2 = 1.0 / (HIDDEN_DIM ** 0.5)
    w1 = jax.random.uniform(k1, (INPUT_DIM, HIDDEN_DIM), jnp.float32, -bound1, bound1)
    b1 = jax.random.uniform(k2, (HIDDEN_DIM,), jnp.float32, -bound1, bound1)
    gamma = jnp.ones((HIDDEN_DIM,), jnp.float32)
    beta = jnp.zeros((HIDDEN_DIM,), jnp.float32)
    w2 = jax.random.uniform(k3, (HIDDEN_DIM, OUTPUT_DIM), jnp.float32, -bound2, bound2)
    b2 = jax.random.uniform(k4, (OUTPUT_DIM,), jnp.float32, -bound2, bound2)
    return (w1, b1, gamma, beta, w2, b2)


def _reference_forward(signals, params):
    """Pure-JAX reference of the same forward pass (for correctness check)."""
    w1, b1, gamma, beta, w2, b2 = params
    h = signals @ w1 + b1
    mu = jnp.mean(h, axis=-1, keepdims=True)
    var = jnp.mean((h - mu) ** 2, axis=-1, keepdims=True)
    hn = (h - mu) / jnp.sqrt(var + LN_EPS) * gamma + beta
    hr = jnp.maximum(hn, 0.0)
    return hr @ w2 + b2


if __name__ == "__main__":
    key = jax.random.PRNGKey(0)
    kp, kg, kb, kx, kx2 = jax.random.split(key, 5)

    params = init_params(kp)
    # Non-trivial LayerNorm affine params so the check exercises gamma/beta wiring
    # (forward semantics are independent of init values).
    w1, b1, _, _, w2, b2 = params
    gamma = 1.0 + 0.1 * jax.random.normal(kg, (HIDDEN_DIM,), jnp.float32)
    beta = 0.1 * jax.random.normal(kb, (HIDDEN_DIM,), jnp.float32)
    params = (w1, b1, gamma, beta, w2, b2)

    # Module input is x = (rgb, signals); video path disabled -> rgb unused (None).
    B = 8
    signals = jax.random.normal(kx, (B, INPUT_DIM), jnp.float32)
    rgb = None  # TODO(synk): pretrained video transformer backbones (ViViT/VideoMAE/Timesformer)
                #             have no in-kernel equivalent; signals-only path implemented.
    x = (rgb, signals)

    out = aggregation_transformer_forward(x[1], params)
    out = jax.block_until_ready(out)
    ref = _reference_forward(signals, params)
    assert out.shape == (B, OUTPUT_DIM)
    assert jnp.allclose(out, ref, atol=1e-4, rtol=1e-4), "mismatch vs reference (B=8)"

    # Second check: non-multiple batch exercises the ragged last block (no wrapper pad).
    B2 = 200
    signals2 = jax.random.normal(kx2, (B2, INPUT_DIM), jnp.float32)
    out2 = jax.block_until_ready(aggregation_transformer_forward(signals2, params))
    ref2 = _reference_forward(signals2, params)
    assert out2.shape == (B2, OUTPUT_DIM)
    assert jnp.allclose(out2, ref2, atol=1e-4, rtol=1e-4), "mismatch vs reference (B=200)"

    print("KERNEL_OK")
</pallas_src>

<mosaic_0001>
module attributes {stable_mosaic.version = 11 : i64} {
  func.func @_mlp_kernel(%arg0: i32, %arg1: memref<128x20xf32, #tpu.memory_space<vmem>>, %arg2: memref<32x20xf32, #tpu.memory_space<vmem>>, %arg3: memref<32x4xf32, #tpu.memory_space<vmem>>, %arg4: memref<2x32xf32, #tpu.memory_space<vmem>>, %arg5: memref<2x128xf32, #tpu.memory_space<vmem>>) attributes {dimension_semantics = [#tpu.dimension_semantics<parallel>], iteration_bounds = array<i64: 1>, scalar_prefetch = 0 : i64, scratch_operands = 0 : i64, tpu.core_type = #tpu.core_type<tc>, window_params = [{transform_indices = @transform_0, window_bounds = array<i64: 128, 20>}, {pipeline_mode = #tpu.pipeline_mode<synchronous>, transform_indices = @transform_1, window_bounds = array<i64: 32, 20>}, {pipeline_mode = #tpu.pipeline_mode<synchronous>, transform_indices = @transform_2, window_bounds = array<i64: 32, 4>}, {pipeline_mode = #tpu.pipeline_mode<synchronous>, transform_indices = @transform_3, window_bounds = array<i64: 2, 32>}, {transform_indices = @transform_4, window_bounds = array<i64: 2, 128>}]} {
    %c0 = arith.constant 0 : index
    %c0_0 = arith.constant 0 : index
    %0 = vector.load %arg1[%c0, %c0_0] : memref<128x20xf32, #tpu.memory_space<vmem>>, vector<128x20xf32>
    %c0_1 = arith.constant 0 : index
    %c0_2 = arith.constant 0 : index
    %1 = vector.load %arg3[%c0_1, %c0_2] : memref<32x4xf32, #tpu.memory_space<vmem>>, vector<32x1xf32>
    %c0_3 = arith.constant 0 : index
    %c1 = arith.constant 1 : index
    %2 = vector.load %arg3[%c0_3, %c1] : memref<32x4xf32, #tpu.memory_space<vmem>>, vector<32x1xf32>
    %c0_4 = arith.constant 0 : index
    %c2 = arith.constant 2 : index
    %3 = vector.load %arg3[%c0_4, %c2] : memref<32x4xf32, #tpu.memory_space<vmem>>, vector<32x1xf32>
    %c0_5 = arith.constant 0 : index
    %c3 = arith.constant 3 : index
    %4 = vector.load %arg3[%c0_5, %c3] : memref<32x4xf32, #tpu.memory_space<vmem>>, vector<2x1xf32>
    %c0_6 = arith.constant 0 : index
    %c0_7 = arith.constant 0 : index
    %5 = vector.load %arg2[%c0_6, %c0_7] : memref<32x20xf32, #tpu.memory_space<vmem>>, vector<32x20xf32>
    %cst = arith.constant dense<0.000000e+00> : vector<32x128xf32>
    %6 = tpu.matmul %5, %0, %cst {dimension_numbers = #tpu.dot_dimension_numbers<[1], [1], [0], [0], [0, 0, 1, 0], [], []>} : vector<32x20xf32>, vector<128x20xf32>, vector<32x128xf32> -> vector<32x128xf32>
    %7 = vector.broadcast %1 : vector<32x1xf32> to vector<32x128xf32>
    %8 = arith.addf %6, %7 : vector<32x128xf32>
    %cst_8 = arith.constant dense<0.000000e+00> : vector<128xf32>
    %9 = vector.multi_reduction <add>, %8, %cst_8 [0] : vector<32x128xf32> to vector<128xf32>
    %10 = vector.shape_cast %9 : vector<128xf32> to vector<1x128xf32>
    %cst_9 = arith.constant 3.200000e+01 : f32
    %11 = vector.broadcast %cst_9 : f32 to vector<1x128xf32>
    %12 = arith.divf %10, %11 : vector<1x128xf32>
    %13 = vector.broadcast %12 : vector<1x128xf32> to vector<32x128xf32>
    %14 = arith.subf %8, %13 : vector<32x128xf32>
    %15 = vector.broadcast %12 : vector<1x128xf32> to vector<32x128xf32>
    %16 = arith.subf %8, %15 : vector<32x128xf32>
    %17 = arith.mulf %14, %16 : vector<32x128xf32>
    %cst_10 = arith.constant dense<0.000000e+00> : vector<128xf32>
    %18 = vector.multi_reduction <add>, %17, %cst_10 [0] : vector<32x128xf32> to vector<128xf32>
    %19 = vector.shape_cast %18 : vector<128xf32> to vector<1x128xf32>
    %cst_11 = arith.constant 3.200000e+01 : f32
    %20 = vector.broadcast %cst_11 : f32 to vector<1x128xf32>
    %21 = arith.divf %19, %20 : vector<1x128xf32>
    %22 = vector.broadcast %12 : vector<1x128xf32> to vector<32x128xf32>
    %23 = arith.subf %8, %22 : vector<32x128xf32>
    %cst_12 = arith.constant 9.99999974E-6 : f32
    %24 = vector.broadcast %cst_12 : f32 to vector<1x128xf32>
    %25 = arith.addf %21, %24 : vector<1x128xf32>
    %26 = math.rsqrt %25 : vector<1x128xf32>
    %27 = vector.broadcast %26 : vector<1x128xf32> to vector<32x128xf32>
    %28 = arith.mulf %23, %27 : vector<32x128xf32>
    %29 = vector.broadcast %2 : vector<32x1xf32> to vector<32x128xf32>
    %30 = arith.mulf %28, %29 : vector<32x128xf32>
    %31 = vector.broadcast %3 : vector<32x1xf32> to vector<32x128xf32>
    %32 = arith.addf %30, %31 : vector<32x128xf32>
    %cst_13 = arith.constant 0.000000e+00 : f32
    %33 = vector.broadcast %cst_13 : f32 to vector<32x128xf32>
    %34 = arith.maximumf %32, %33 : vector<32x128xf32>
    %c0_14 = arith.constant 0 : index
    %c0_15 = arith.constant 0 : index
    %35 = vector.load %arg4[%c0_14, %c0_15] : memref<2x32xf32, #tpu.memory_space<vmem>>, vector<2x32xf32>
    %cst_16 = arith.constant dense<0.000000e+00> : vector<2x128xf32>
    %36 = tpu.matmul %35, %34, %cst_16 {dimension_numbers = #tpu.dot_dimension_numbers<[1], [0], [0], [1], [0, 0, 1, 1], [], []>} : vector<2x32xf32>, vector<32x128xf32>, vector<2x128xf32> -> vector<2x128xf32>
    %37 = vector.broadcast %4 : vector<2x1xf32> to vector<2x128xf32>
    %38 = arith.addf %36, %37 : vector<2x128xf32>
    %c0_17 = arith.constant 0 : index
    %c0_18 = arith.constant 0 : index
    %39 = vector.load %arg5[%c0_17, %c0_18] : memref<2x128xf32, #tpu.memory_space<vmem>>, vector<2x128xf32>
    tpu.vector_store %arg5[%c0_17, %c0_18], %38 {strides = array<i32>} : memref<2x128xf32, #tpu.memory_space<vmem>>, vector<2x128xf32>,
    return
  }
  func.func @transform_0(%arg0: i32) -> (i32, i32) {
    %c0_i32 = arith.constant 0 : i32
    %c0_i32_0 = arith.constant 0 : i32
    return %arg0, %c0_i32 : i32, i32
  }
  func.func @transform_1(%arg0: i32) -> (i32, i32) {
    %c0_i32 = arith.constant 0 : i32
    %c0_i32_0 = arith.constant 0 : i32
    %c0_i32_1 = arith.constant 0 : i32
    return %c0_i32, %c0_i32_0 : i32, i32
  }
  func.func @transform_2(%arg0: i32) -> (i32, i32) {
    %c0_i32 = arith.constant 0 : i32
    %c0_i32_0 = arith.constant 0 : i32
    %c0_i32_1 = arith.constant 0 : i32
    return %c0_i32, %c0_i32_0 : i32, i32
  }
  func.func @transform_3(%arg0: i32) -> (i32, i32) {
    %c0_i32 = arith.constant 0 : i32
    %c0_i32_0 = arith.constant 0 : i32
    %c0_i32_1 = arith.constant 0 : i32
    return %c0_i32, %c0_i32_0 : i32, i32
  }
  func.func @transform_4(%arg0: i32) -> (i32, i32) {
    %c0_i32 = arith.constant 0 : i32
    %c0_i32_0 = arith.constant 0 : i32
    return %c0_i32, %arg0 : i32, i32
  }
}

</mosaic_0001>

<llo_original>
// kernel: tpu_custom_call.1
$region0: #{tpu_custom_call.1}
  #allocation0 [shape = 'u32[]', space=smem, size = 0x4, offset = 0x4, fixed_abs, tag = 'smem constant byte address 0x4 - core index']
  #allocation1 [shape = 'u32[144,128]{1,0:T(1,128)}', space=vmem, size = 0x12000, scoped, tag = 'internal scratch']
  %s0 = inlined_call_operand.vmem [shape: f32[8,20], index: 0, kind: input, shape index: {}]
  %s1 = inlined_call_operand.vmem [shape: f32[32,20], index: 1, kind: input, shape index: {}]
  %s2 = inlined_call_operand.vmem [shape: f32[32,4], index: 2, kind: input, shape index: {}]
  %s3 = inlined_call_operand.vmem [shape: f32[2,32], index: 3, kind: input, shape index: {}]
  %s4 = inlined_call_operand.hbm [shape: f32[2,8], index: 4, kind: output, shape index: {}]
  %s5 = sld [smem:[#allocation0]]
  $region26: #{tpu_custom_call.1} parent=0
    _
  %s7 = ssub.s32 1, %s5
  %s8 = scalar_select 0, %s7, %s5
  $region1: #{tpu_custom_call.1} parent=0
    #allocation2 [shape = 'u8[1024]{0}', space=vmem, size = 0x400, scoped, tag = 'output window, operand 0, single buffered']
    #allocation3 [shape = 's32[1]{0}', space=sflag, size = 0x4, scoped, tag = 'scoped memory for tpu_custom_call.1']
    %9 = vsyncpa [#allocation3], 0
    // Predicated region
    $region2: #{tpu_custom_call.1} parent=1 // pred_check
      _
    $region3: #{tpu_custom_call.1} parent=1 // pred_check_branch
      %11 = sbr.rel (0) target = $region5
    $region4: #{tpu_custom_call.1} parent=1 // pred_region
      _
    $region5: #{tpu_custom_call.1} parent=1 // pred_fallthru
      _
    // Predicated region
    $region6: #{tpu_custom_call.1} parent=1 // pred_check
      _
    $region7: #{tpu_custom_call.1} parent=1 // pred_check_branch
      %13 = sbr.rel (0) target = $region9
    $region8: #{tpu_custom_call.1} parent=1 // pred_region
      _
    $region9: #{tpu_custom_call.1} parent=1 // pred_fallthru
      _
    // Predicated region
    $region10: #{tpu_custom_call.1} parent=1 // pred_check
      _
    $region11: #{tpu_custom_call.1} parent=1 // pred_check_branch
      %15 = sbr.rel (0) target = $region13
    $region12: #{tpu_custom_call.1} parent=1 // pred_region
      _
    $region13: #{tpu_custom_call.1} parent=1 // pred_fallthru
      _
    // Predicated region
    $region14: #{tpu_custom_call.1} parent=1 // pred_check
      _
    $region15: #{tpu_custom_call.1} parent=1 // pred_check_branch
      %17 = sbr.rel (0) target = $region17
    $region16: #{tpu_custom_call.1} parent=1 // pred_region
      _
    $region17: #{tpu_custom_call.1} parent=1 // pred_fallthru
      _
    %v18 = vld [vmem:[%s0] sm:$0xff]
    %v19 = vld [vmem:[%s0 + $0x8] sm:$0xff]
    %v20 = vld [vmem:[%s0 + $0x10] sm:$0xff]
    %v21 = vld [vmem:[%s0 + $0x18] sm:$0xff]
    %v22 = vld [vmem:[%s0 + $0x20] sm:$0xff]
    %v23 = vld [vmem:[%s0 + $0x28] sm:$0xff]
    %v24 = vld [vmem:[%s0 + $0x30] sm:$0xff]
    %v25 = vld [vmem:[%s0 + $0x38] sm:$0xff]
    %v26 = vld [vmem:[%s0 + $0x40] sm:$0xff]
    %v27 = vld [vmem:[%s0 + $0x48] sm:$0xff]
    %v28 = vld [vmem:[%s0 + $0x50] sm:$0xff]
    %v29 = vld [vmem:[%s0 + $0x58] sm:$0xff]
    %v30 = vld [vmem:[%s0 + $0x60] sm:$0xff]
    %v31 = vld [vmem:[%s0 + $0x68] sm:$0xff]
    %v32 = vld [vmem:[%s0 + $0x70] sm:$0xff]
    %v33 = vld [vmem:[%s0 + $0x78] sm:$0xff]
    %v34 = vld [vmem:[%s2] sm:$0xff]
    %v35 = vld [vmem:[%s2 + $0x8] sm:$0xff]
    %v36 = vld [vmem:[%s2 + $0x10] sm:$0xff]
    %v37 = vld [vmem:[%s2 + $0x18] sm:$0xff]
    %v38 = vld [vmem:[%s2] sm:$0x3]
    %v39 = vld [vmem:[%s1] sm:$0xff]
    %v40 = vld [vmem:[%s1 + $0x8] sm:$0xff]
    %v41 = vld [vmem:[%s1 + $0x10] sm:$0xff]
    %v42 = vld [vmem:[%s1 + $0x18] sm:$0xff]
    %44 = vset.pattern.permute.xlu0 0
    %45 = vperm.xlu0 %44, %v34
    %v46 = vpop.permute.xlu0 %45
    %49 = vset.pattern.permute.xlu0 0
    %50 = vperm.xlu0 %49, %v35
    %v51 = vpop.permute.xlu0 %50
    %54 = vset.pattern.permute.xlu0 0
    %55 = vperm.xlu0 %54, %v36
    %v56 = vpop.permute.xlu0 %55
    %59 = vset.pattern.permute.xlu0 0
    %60 = vperm.xlu0 %59, %v37
    %v61 = vpop.permute.xlu0 %60
    %vm63 = vcmask 162816
    %v65 = vsel %vm63, %v39, 0
    %v68 = vsel %vm63, %v40, 0
    %v71 = vsel %vm63, %v41, 0
    %v74 = vsel %vm63, %v42, 0
    %v77 = vsel %vm63, %v18, 0
    %v80 = vsel %vm63, %v19, 0
    %v83 = vsel %vm63, %v20, 0
    %v86 = vsel %vm63, %v21, 0
    %v89 = vsel %vm63, %v22, 0
    %v92 = vsel %vm63, %v23, 0
    %v95 = vsel %vm63, %v24, 0
    %v98 = vsel %vm63, %v25, 0
    %v101 = vsel %vm63, %v26, 0
    %v104 = vsel %vm63, %v27, 0
    %v107 = vsel %vm63, %v28, 0
    %v110 = vsel %vm63, %v29, 0
    %v113 = vsel %vm63, %v30, 0
    %v116 = vsel %vm63, %v31, 0
    %v119 = vsel %vm63, %v32, 0
    %v122 = vsel %vm63, %v33, 0
    %124 = vmatprep.subr.mxu0 0.0
    %125 = vmatpush1.xpose.msra.mxu0 %v77
    %126 = vmatprep.subr.mxu0 0.0
    %127 = vmatpush1.xpose.msra.mxu0 %v80
    %128 = vmatprep.subr.mxu0 0.0
    %129 = vmatpush1.xpose.msra.mxu0 %v83
    %130 = vmatprep.subr.mxu0 0.0
    %131 = vmatpush1.xpose.msra.mxu0 %v86
    %132 = vmatprep.subr.mxu0 0.0
    %133 = vmatpush1.xpose.msra.mxu0 %v89
    %134 = vmatprep.subr.mxu0 0.0
    %135 = vmatpush1.xpose.msra.mxu0 %v92
    %136 = vmatprep.subr.mxu0 0.0
    %137 = vmatpush1.xpose.msra.mxu0 %v95
    %138 = vmatprep.subr.mxu0 0.0
    %139 = vmatpush1.xpose.msra.mxu0 %v98
    %140 = vmatprep.subr.mxu0 0.0
    %141 = vmatpush1.xpose.msra.mxu0 %v101
    %142 = vmatprep.subr.mxu0 0.0
    %143 = vmatpush1.xpose.msra.mxu0 %v104
    %144 = vmatprep.subr.mxu0 0.0
    %145 = vmatpush1.xpose.msra.mxu0 %v107
    %146 = vmatprep.subr.mxu0 0.0
    %147 = vmatpush1.xpose.msra.mxu0 %v110
    %148 = vmatprep.subr.mxu0 0.0
    %149 = vmatpush1.xpose.msra.mxu0 %v113
    %150 = vmatprep.subr.mxu0 0.0
    %151 = vmatpush1.xpose.msra.mxu0 %v116
    %152 = vmatprep.subr.mxu0 0.0
    %153 = vmatpush1.xpose.msra.mxu0 %v119
    %154 = vmatprep.subr.mxu0 0.0
    %155 = vmatpush1.xpose.msra.mxu0 %v122
    %156 = vmatprep.subr.mxu0 0.0
    %157 = vmatpush1.xpose.msra.mxu0 0.0
    %158 = vmatprep.subr.mxu0 0.0
    %159 = vmatpush1.xpose.msra.mxu0 0.0
    %160 = vmatprep.subr.mxu0 0.0
    %161 = vmatpush1.xpose.msra.mxu0 0.0
    %162 = vmatprep.subr.mxu0 0.0
    %163 = vmatpush1.xpose.msra.mxu0 0.0
    %164 = vmatprep.subr.mxu0 0.0
    %165 = vmatpush1.xpose.msra.mxu0 0.0
    %166 = vmatprep.subr.mxu0 0.0
    %167 = vmatpush1.xpose.msra.mxu0 0.0
    %168 = vmatprep.subr.mxu0 0.0
    %169 = vmatpush1.xpose.msra.mxu0 0.0
    %170 = vmatprep.subr.mxu0 0.0
    %171 = vmatpush1.xpose.msra.mxu0 0.0
    %172 = vmatprep.subr.mxu0 0.0
    %173 = vmatpush1.xpose.msra.mxu0 0.0
    %174 = vmatprep.subr.mxu0 0.0
    %175 = vmatpush1.xpose.msra.mxu0 0.0
    %176 = vmatprep.subr.mxu0 0.0
    %177 = vmatpush1.xpose.msra.mxu0 0.0
    %178 = vmatprep.subr.mxu0 0.0
    %179 = vmatpush1.xpose.msra.mxu0 0.0
    %180 = vmatprep.subr.mxu0 0.0
    %181 = vmatpush1.xpose.msra.mxu0 0.0
    %182 = vmatprep.subr.mxu0 0.0
    %183 = vmatpush1.xpose.msra.mxu0 0.0
    %184 = vmatprep.subr.mxu0 0.0
    %185 = vmatpush1.xpose.msra.mxu0 0.0
    %186 = vmatprep.subr.mxu0 0.0
    %187 = vmatpush1.xpose.msra.mxu0 0.0
    %188 = vmatprep.mubr.f32.mxu0 0.0
    %189 = vmatmul.mubr.f32.gmra.mrb[0].mxu0 %v65
    %v190 = vpop.f32.mrb[0].mxu0
    %v191 = vadd.f32 %v46, %v190
    %v192 = vpop.f32.mrb[0].mxu0
    %193 = vmatprep.mubr.f32.mxu0 0.0
    %194 = vmatmul.mubr.f32.gmra.mrb[0].mxu0 %v68
    %v195 = vpop.f32.mrb[0].mxu0
    %v196 = vadd.f32 %v51, %v195
    %v197 = vpop.f32.mrb[0].mxu0
    %198 = vmatprep.mubr.f32.mxu0 0.0
    %199 = vmatmul.mubr.f32.gmra.mrb[0].mxu0 %v71
    %v200 = vpop.f32.mrb[0].mxu0
    %v201 = vadd.f32 %v56, %v200
    %v202 = vpop.f32.mrb[0].mxu0
    %203 = vmatprep.mubr.f32.mxu0 0.0
    %204 = vmatmul.mubr.f32.gmra.mrb[0].mxu0 %v74
    %v205 = vpop.f32.mrb[0].mxu0
    %v206 = vadd.f32 %v61, %v205
    %v207 = vpop.f32.mrb[0].mxu0
    %208 = vdwg.mxu0
    %v209 = vadd.f32 %v191, %v196
    %v210 = vadd.f32 %v209, %v201
    %v211 = vadd.f32 %v210, %v206
    %v212 = vrot.slane %v211, 4
    %v213 = vadd.f32 %v211, %v212
    %v214 = vrot.slane %v213, 2
    %v215 = vadd.f32 %v213, %v214
    %v216 = vrot.slane %v215, 1
    %v217 = vadd.f32 %v215, %v216
    %v218 = vrcp.pop 32.0
    %v219 = vmul.f32 %v217, %v218
    %v220 = vsub.f32 %v191, %v219
    %v221 = vsub.f32 %v196, %v219
    %v222 = vsub.f32 %v201, %v219
    %v223 = vsub.f32 %v206, %v219
    %v224 = vmul.f32 %v220, %v220
    %v225 = vmul.f32 %v221, %v221
    %v226 = vmul.f32 %v222, %v222
    %v227 = vmul.f32 %v223, %v223
    %v228 = vadd.f32 %v224, %v225
    %v229 = vadd.f32 %v228, %v226
    %v230 = vadd.f32 %v229, %v227
    %v231 = vrot.slane %v230, 4
    %v232 = vadd.f32 %v230, %v231
    %v233 = vrot.slane %v232, 2
    %v234 = vadd.f32 %v232, %v233
    %v235 = vrot.slane %v234, 1
    %v236 = vadd.f32 %v234, %v235
    %v237 = vmul.f32 %v236, %v218
    %v238 = vadd.f32 %v237, 1e-05
    %v239 = vrsqrt.pop %v238
    %v240 = vmul.f32 %v220, %v239
    %v241 = vmul.f32 %v221, %v239
    %v242 = vmul.f32 %v222, %v239
    %v243 = vmul.f32 %v223, %v239
    %244 = vset.pattern.permute.xlu0 1
    %245 = vperm.xlu0 %244, %v34
    %v246 = vpop.permute.xlu0 %245
    %248 = vset.pattern.permute.xlu0 1
    %249 = vperm.xlu0 %248, %v35
    %v250 = vpop.permute.xlu0 %249
    %252 = vset.pattern.permute.xlu0 1
    %253 = vperm.xlu0 %252, %v36
    %v254 = vpop.permute.xlu0 %253
    %256 = vset.pattern.permute.xlu0 1
    %257 = vperm.xlu0 %256, %v37
    %v258 = vpop.permute.xlu0 %257
    %v260 = vmul.f32 %v240, %v246
    %v261 = vmul.f32 %v241, %v250
    %v262 = vmul.f32 %v242, %v254
    %v263 = vmul.f32 %v243, %v258
    %264 = vset.pattern.permute.xlu0 2
    %265 = vperm.xlu0 %264, %v34
    %v266 = vpop.permute.xlu0 %265
    %268 = vset.pattern.permute.xlu0 2
    %269 = vperm.xlu0 %268, %v35
    %v270 = vpop.permute.xlu0 %269
    %272 = vset.pattern.permute.xlu0 2
    %273 = vperm.xlu0 %272, %v36
    %v274 = vpop.permute.xlu0 %273
    %276 = vset.pattern.permute.xlu0 2
    %277 = vperm.xlu0 %276, %v37
    %v278 = vpop.permute.xlu0 %277
    %v280 = vadd.f32 %v260, %v266
    %v281 = vadd.f32 %v261, %v270
    %v282 = vadd.f32 %v262, %v274
    %v283 = vadd.f32 %v263, %v278
    %v284 = vmax.f32 %v280, 0.0
    %v285 = vmax.f32 %v281, 0.0
    %v286 = vmax.f32 %v282, 0.0
    %v287 = vmax.f32 %v283, 0.0
    %v288 = vld [vmem:[%s3] sm:$0x3]
    %290 = vset.pattern.permute.xlu0 3
    %291 = vperm.xlu0 %290, %v38
    %v292 = vpop.permute.xlu0 %291
    %vm294 = vcmask 261120
    %v296 = vsel %vm294, %v288, 0
    %298 = vmatprep.subr.mxu0 0.0
    %299 = vmatpush1.msra.mxu0 %v284
    %300 = vmatprep.subr.mxu0 0.0
    %301 = vmatpush1.msra.mxu0 %v285
    %302 = vmatprep.subr.mxu0 0.0
    %303 = vmatpush1.msra.mxu0 %v286
    %304 = vmatprep.subr.mxu0 0.0
    %305 = vmatpush1.msra.mxu0 %v287
    %306 = vmatprep.subr.mxu0 0.0
    %307 = vmatpush1.msra.mxu0 0.0
    %308 = vmatprep.subr.mxu0 0.0
    %309 = vmatpush1.msra.mxu0 0.0
    %310 = vmatprep.subr.mxu0 0.0
    %311 = vmatpush1.msra.mxu0 0.0
    %312 = vmatprep.subr.mxu0 0.0
    %313 = vmatpush1.msra.mxu0 0.0
    %314 = vmatprep.subr.mxu0 0.0
    %315 = vmatpush1.msra.mxu0 0.0
    %316 = vmatprep.subr.mxu0 0.0
    %317 = vmatpush1.msra.mxu0 0.0
    %318 = vmatprep.subr.mxu0 0.0
    %319 = vmatpush1.msra.mxu0 0.0
    %320 = vmatprep.subr.mxu0 0.0
    %321 = vmatpush1.msra.mxu0 0.0
    %322 = vmatprep.subr.mxu0 0.0
    %323 = vmatpush1.msra.mxu0 0.0
    %324 = vmatprep.subr.mxu0 0.0
    %325 = vmatpush1.msra.mxu0 0.0
    %326 = vmatprep.subr.mxu0 0.0
    %327 = vmatpush1.msra.mxu0 0.0
    %328 = vmatprep.subr.mxu0 0.0
    %329 = vmatpush1.msra.mxu0 0.0
    %330 = vmatprep.subr.mxu0 0.0
    %331 = vmatpush1.msra.mxu0 0.0
    %332 = vmatprep.subr.mxu0 0.0
    %333 = vmatpush1.msra.mxu0 0.0
    %334 = vmatprep.subr.mxu0 0.0
    %335 = vmatpush1.msra.mxu0 0.0
    %336 = vmatprep.subr.mxu0 0.0
    %337 = vmatpush1.msra.mxu0 0.0
    %338 = vmatprep.subr.mxu0 0.0
    %339 = vmatpush1.msra.mxu0 0.0
    %340 = vmatprep.subr.mxu0 0.0
    %341 = vmatpush1.msra.mxu0 0.0
    %342 = vmatprep.subr.mxu0 0.0
    %343 = vmatpush1.msra.mxu0 0.0
    %344 = vmatprep.subr.mxu0 0.0
    %345 = vmatpush1.msra.mxu0 0.0
    %346 = vmatprep.subr.mxu0 0.0
    %347 = vmatpush1.msra.mxu0 0.0
    %348 = vmatprep.subr.mxu0 0.0
    %349 = vmatpush1.msra.mxu0 0.0
    %350 = vmatprep.subr.mxu0 0.0
    %351 = vmatpush1.msra.mxu0 0.0
    %352 = vmatprep.subr.mxu0 0.0
    %353 = vmatpush1.msra.mxu0 0.0
    %354 = vmatprep.subr.mxu0 0.0
    %355 = vmatpush1.msra.mxu0 0.0
    %356 = vmatprep.subr.mxu0 0.0
    %357 = vmatpush1.msra.mxu0 0.0
    %358 = vmatprep.subr.mxu0 0.0
    %359 = vmatpush1.msra.mxu0 0.0
    %360 = vmatprep.subr.mxu0 0.0
    %361 = vmatpush1.msra.mxu0 0.0
    %362 = vmatprep.mubr.f32.mxu0 0.0
    %363 = vmatmul.mubr.f32.gmra.mrb[0].mxu0 %v296
    %v364 = vpop.f32.mrb[0].mxu0
    %v365 = vadd.f32 %v292, %v364
    %v366 = vpop.f32.mrb[0].mxu0
    %367 = vdwg.mxu0
    %368 = vst [vmem:[#allocation2] sm:$0x3] %v365
    // Predicated region
    $region18: #{tpu_custom_call.1} parent=1 // pred_check
      _
    $region19: #{tpu_custom_call.1} parent=1 // pred_check_branch
      %370 = sbr.rel (0) target = $region21
    $region20: #{tpu_custom_call.1} parent=1 // pred_region
      %s372 = ssub.s32 32, 32
      %373 = vsyncadd [#allocation3], %s372
      %s375 = sshll.u32 [#allocation2], 4
      %s376 = int_to_ptr.vmem [resolvable:$true] %s375
      %378 = dma.vmem_to_hbm [thread:$0]  %s376, 32, %s4, [#allocation3]
    $region21: #{tpu_custom_call.1} parent=1 // pred_fallthru
      _
    // Predicated region
    $region22: #{tpu_custom_call.1} parent=1 // pred_check
      _
    $region23: #{tpu_custom_call.1} parent=1 // pred_check_branch
      %380 = sbr.rel (0) target = $region25
    $region24: #{tpu_custom_call.1} parent=1 // pred_region
      %381 = dma.done [#allocation3], 32
    $region25: #{tpu_custom_call.1} parent=1 // pred_fallthru
      _
    %382 = vsyncpa [#allocation3], 1

</llo_original>
